<compile_context>
chip_gen: v6e
topology: v6e:2x2x1
jax: 0.10.0
libtpu: 0.0.40
codegen_flags: <defaults>
</compile_context>

<pallas_src>
import math

import jax
import jax.numpy as jnp
from jax import lax
from jax.experimental import pallas as pl
from jax.experimental.pallas import tpu as pltpu

_INV_SQRT2 = 1.0 / math.sqrt(2.0)


def _round_up(x, m):
    return (x + m - 1) // m * m


def _sublane_multiple(dtype):
    return {4: 8, 2: 16, 1: 32}.get(jnp.dtype(dtype).itemsize, 8)


def _vmem_capacity_bytes():
    try:
        return int(pltpu.get_tpu_info().vmem_capacity_bytes)
    except Exception:
        return 64 * 1024 * 1024  # conservative (v7x per-TC)


def _vmem_estimate(tile_m, tile_h, tile_n, in_p, hid_p, itemsize):
    db = 2  # default double-buffering depth for pipelined blocks
    est = itemsize * db * (tile_m * in_p          # x tile
                           + in_p * tile_h        # w1 tile
                           + 8 * tile_h           # b1 tile (sublane-padded)
                           + tile_h * tile_n      # w2 tile
                           + 8 * tile_n           # b2 tile
                           + tile_m * tile_n)     # out tile
    est += 4 * tile_m * tile_n                    # f32 accumulator
    est += itemsize * tile_m * hid_p              # hidden-activation cache
    return est


def _mlp_kernel(x_ref, w1_ref, b1_ref, w2_ref, b2_ref, o_ref, acc_ref, hcache_ref):
    # grid = (i: M tiles [parallel], j: out tiles, h: hidden tiles [reduction]).
    j = pl.program_id(1)
    h = pl.program_id(2)

    @pl.when(h == 0)
    def _init():
        acc_ref[...] = jnp.zeros_like(acc_ref)

    # fc1 + GELU computed once per (i, h) tile (at j == 0), cached in VMEM;
    # all later out tiles (j > 0) reuse the cached activations.
    @pl.when(j == 0)
    def _fc1():
        a = jnp.dot(x_ref[...], w1_ref[...], preferred_element_type=jnp.float32)
        a = a + b1_ref[...].astype(jnp.float32)
        # Exact GELU (erf) -> matches torch.nn.GELU(approximate='none').
        a = 0.5 * a * (1.0 + lax.erf(a * jnp.float32(_INV_SQRT2)))
        hcache_ref[h] = a.astype(hcache_ref.dtype)

    acc_ref[...] += jnp.dot(hcache_ref[h], w2_ref[...],
                            preferred_element_type=jnp.float32)

    @pl.when(h == pl.num_programs(2) - 1)
    def _finalize():
        # dropout p = 0.0 => identity; add fc2 bias, cast once per out tile.
        o_ref[...] = (acc_ref[...] + b2_ref[...].astype(jnp.float32)
                      ).astype(o_ref.dtype)


def prepare_mlp(w1, b1, w2, b2, *, compute_dtype=None,
                tile_m_cap=256, tile_h=512, tile_n=512):
    """Pad + (optionally) cast weights once; pick VMEM-budgeted tile sizes."""
    in_dim, hidden = w1.shape
    out_dim = w2.shape[1]
    compute_dtype = jnp.dtype(compute_dtype) if compute_dtype else jnp.dtype(w1.dtype)
    itemsize = compute_dtype.itemsize

    in_p = _round_up(in_dim, 128)
    hid_p = _round_up(hidden, 128)
    out_p = _round_up(out_dim, 128)

    tile_h = min(tile_h, hid_p)
    tile_n = min(tile_n, out_p)

    vmem_cap = _vmem_capacity_bytes()
    budget = int(0.55 * vmem_cap)
    # Shrink tiles (keeping 128-lane / 8-sublane alignment) until the VMEM
    # footprint fits the generation's budget (v7x 64 MiB vs v5e/v6e 128 MiB).
    # TODO(synk): add an in_dim reduction tiling for very large in_dim; the
    # x / w1 tiles currently carry the full padded in_dim.
    tm_cap = tile_m_cap
    while _vmem_estimate(tm_cap, tile_h, tile_n, in_p, hid_p, itemsize) > budget:
        if tile_h > 128:
            tile_h = max(128, tile_h // 2)
        elif tile_n > 128:
            tile_n = max(128, tile_n // 2)
        elif tm_cap > 64:
            tm_cap = max(64, tm_cap // 2)
        else:
            break

    hid_p = _round_up(hid_p, tile_h)
    out_p = _round_up(out_p, tile_n)

    # Zero padding is exact: padded in_dim cols hit zero rows of W1, padded
    # hidden cols give GELU(0 + 0) = 0 and hit zero rows of W2, padded out
    # cols / rows are sliced off after the kernel.
    w1_p = jnp.pad(w1, ((0, in_p - in_dim), (0, hid_p - hidden))).astype(compute_dtype)
    b1_p = jnp.pad(b1.reshape(1, -1), ((0, 0), (0, hid_p - hidden))).astype(jnp.float32)
    w2_p = jnp.pad(w2, ((0, hid_p - hidden), (0, out_p - out_dim))).astype(compute_dtype)
    b2_p = jnp.pad(b2.reshape(1, -1), ((0, 0), (0, out_p - out_dim))).astype(jnp.float32)

    return dict(w1=w1_p, b1=b1_p, w2=w2_p, b2=b2_p,
                in_dim=in_dim, hidden=hidden, out_dim=out_dim,
                in_p=in_p, hid_p=hid_p, out_p=out_p,
                tile_m_cap=tm_cap, tile_h=tile_h, tile_n=tile_n,
                compute_dtype=compute_dtype, vmem_cap=vmem_cap)


def mlp_pallas(x, prep):
    """x: (M, in_dim) -> (M, out_dim)."""
    M, in_dim = x.shape
    assert in_dim == prep["in_dim"]
    out_dtype = x.dtype
    cdt = prep["compute_dtype"]
    sub = _sublane_multiple(cdt)

    in_p, hid_p, out_p = prep["in_p"], prep["hid_p"], prep["out_p"]
    tile_h, tile_n = prep["tile_h"], prep["tile_n"]
    hidden, out_dim = prep["hidden"], prep["out_dim"]

    tile_m = max(sub, min(prep["tile_m_cap"], _round_up(M, sub)))
    # Give the megacore-parallel row axis >= 2 iterations when possible (v7x).
    if _round_up(M, tile_m) // tile_m < 2 and M > sub:
        tile_m = max(sub, _round_up(pl.cdiv(M, 2), sub))
    m_p = _round_up(M, tile_m)

    x_p = jnp.pad(x, ((0, m_p - M), (0, in_p - in_dim))).astype(cdt)

    grid = (m_p // tile_m, out_p // tile_n, hid_p // tile_h)
    n_h = grid[2]

    itemsize = jnp.dtype(cdt).itemsize
    vmem_est = _vmem_estimate(tile_m, tile_h, tile_n, in_p, hid_p, itemsize)
    vmem_limit = int(min(0.9 * prep["vmem_cap"],
                         max(32 * 1024 * 1024, vmem_est + (4 << 20))))

    cost = pl.CostEstimate(
        flops=2 * M * (in_dim * hidden + hidden * out_dim),
        transcendentals=M * hidden,  # one erf per hidden activation
        bytes_accessed=itemsize * (M * in_dim + in_dim * hidden
                                   + hidden * out_dim + M * out_dim)
                       + 4 * (hidden + out_dim),
    )

    # W1/b1 only matter at j == 0; for j > 0 pin their block index so Pallas
    # skips the redundant DMA on consecutive grid steps.
    w1_map = lambda i, j, h: (0, jnp.where(j == 0, h, 0))
    b1_map = lambda i, j, h: (0, jnp.where(j == 0, h, 0))

    out_padded = pl.pallas_call(
        _mlp_kernel,
        out_shape=jax.ShapeDtypeStruct((m_p, out_p), out_dtype),
        grid_spec=pltpu.PrefetchScalarGridSpec(
            num_scalar_prefetch=0,
            grid=grid,
            in_specs=[
                pl.BlockSpec((tile_m, in_p), lambda i, j, h: (i, 0)),
                pl.BlockSpec((in_p, tile_h), w1_map),
                pl.BlockSpec((1, tile_h), b1_map),
                pl.BlockSpec((tile_h, tile_n), lambda i, j, h: (h, j)),
                pl.BlockSpec((1, tile_n), lambda i, j, h: (0, j)),
            ],
            out_specs=pl.BlockSpec((tile_m, tile_n), lambda i, j, h: (i, j)),
            scratch_shapes=[
                pltpu.VMEM((tile_m, tile_n), jnp.float32),     # f32 accumulator
                pltpu.VMEM((n_h, tile_m, tile_h), cdt),        # hidden-act cache
            ],
        ),
        compiler_params=pltpu.CompilerParams(
            dimension_semantics=("parallel", "arbitrary", "arbitrary"),
            vmem_limit_bytes=vmem_limit,
        ),
        cost_estimate=cost,
    )(x_p, prep["w1"], prep["b1"], prep["w2"], prep["b2"])

    return out_padded[:M, :out_dim]


def mlp_forward(x_bsd, prep):
    """x_bsd: (B, S, in_dim) -> (B, S, out_dim), like the torch MLP on (B,S,C)."""
    B, S, D = x_bsd.shape
    y2 = mlp_pallas(x_bsd.reshape(B * S, D), prep)
    return y2.reshape(B, S, -1)


def init_params(key, in_dim, hidden_dim, out_dim, dtype=jnp.float32):
    # deterministic synthetic init (torch Linear-like uniform bounds)
    k1, k2, k3, k4 = jax.random.split(key, 4)
    lim1 = 1.0 / math.sqrt(in_dim)
    lim2 = 1.0 / math.sqrt(hidden_dim)
    return {
        "w1": jax.random.uniform(k1, (in_dim, hidden_dim), dtype, -lim1, lim1),
        "b1": jax.random.uniform(k2, (1, hidden_dim), dtype, -lim1, lim1),
        "w2": jax.random.uniform(k3, (hidden_dim, out_dim), dtype, -lim2, lim2),
        "b2": jax.random.uniform(k4, (1, out_dim), dtype, -lim2, lim2),
    }


def _reference(x_bsd, params):
    h = x_bsd @ params["w1"] + params["b1"][0]
    h = 0.5 * h * (1.0 + lax.erf(h / jnp.sqrt(jnp.float32(2.0))))
    return h @ params["w2"] + params["b2"][0]


if __name__ == "__main__":
    key = jax.random.PRNGKey(0)
    B, S, in_dim, hidden_dim, out_dim = 2, 8, 32, 64, 32

    kx, kp = jax.random.split(key)
    x = jax.random.normal(kx, (B, S, in_dim), dtype=jnp.float32)
    params = init_params(kp, in_dim, hidden_dim, out_dim)

    # Pad/cast weights once (hoisted out of the per-call path).  For bf16 MXU
    # operands on v6e/v7x pass compute_dtype=jnp.bfloat16 (looser tolerance).
    prep = prepare_mlp(params["w1"], params["b1"], params["w2"], params["b2"],
                       compute_dtype=jnp.float32)

    y = mlp_forward(x, prep)
    y = jax.block_until_ready(y)

    y_ref = _reference(x, params)
    assert y.shape == (B, S, out_dim)
    assert jnp.allclose(y, y_ref, atol=1e-4, rtol=1e-4)

    print("KERNEL_OK")
</pallas_src>

<mosaic_0001>
module attributes {stable_mosaic.version = 11 : i64} {
  func.func @_mlp_kernel(%arg0: i32, %arg1: i32, %arg2: i32, %arg3: memref<8x128xf32, #tpu.memory_space<vmem>>, %arg4: memref<128x128xf32, #tpu.memory_space<vmem>>, %arg5: memref<1x128xf32, #tpu.memory_space<vmem>>, %arg6: memref<128x128xf32, #tpu.memory_space<vmem>>, %arg7: memref<1x128xf32, #tpu.memory_space<vmem>>, %arg8: memref<8x128xf32, #tpu.memory_space<vmem>>, %arg9: memref<8x128xf32, #tpu.memory_space<vmem>>, %arg10: memref<1x8x128xf32, #tpu.memory_space<vmem>>) attributes {dimension_semantics = [#tpu.dimension_semantics<parallel>, #tpu.dimension_semantics<arbitrary>, #tpu.dimension_semantics<arbitrary>], iteration_bounds = array<i64: 2, 1, 1>, scalar_prefetch = 0 : i64, scratch_operands = 2 : i64, tpu.core_type = #tpu.core_type<tc>, window_params = [{transform_indices = @transform_0, window_bounds = array<i64: 8, 128>}, {transform_indices = @transform_1, window_bounds = array<i64: 128, 128>}, {transform_indices = @transform_2, window_bounds = array<i64: 1, 128>}, {transform_indices = @transform_3, window_bounds = array<i64: 128, 128>}, {transform_indices = @transform_4, window_bounds = array<i64: 1, 128>}, {transform_indices = @transform_5, window_bounds = array<i64: 8, 128>}]} {
    %c0_i32 = arith.constant 0 : i32
    %0 = arith.cmpi eq, %arg2, %c0_i32 : i32
    %1 = arith.extui %0 : i1 to i32
    %c0_i32_0 = arith.constant 0 : i32
    %2 = arith.cmpi ne, %1, %c0_i32_0 : i32
    scf.if %2 {
      %cst_12 = arith.constant 0.000000e+00 : f32
      %17 = vector.broadcast %cst_12 : f32 to vector<8x128xf32>
      %c0_13 = arith.constant 0 : index
      %c0_14 = arith.constant 0 : index
      %18 = vector.load %arg9[%c0_13, %c0_14] : memref<8x128xf32, #tpu.memory_space<vmem>>, vector<8x128xf32>
      tpu.vector_store %arg9[%c0_13, %c0_14], %17 {strides = array<i32>} : memref<8x128xf32, #tpu.memory_space<vmem>>, vector<8x128xf32>,
    } else {
    }
    %c0_i32_1 = arith.constant 0 : i32
    %3 = arith.cmpi eq, %arg1, %c0_i32_1 : i32
    %4 = arith.extui %3 : i1 to i32
    %c0_i32_2 = arith.constant 0 : i32
    %5 = arith.cmpi ne, %4, %c0_i32_2 : i32
    scf.if %5 {
      %c0_12 = arith.constant 0 : index
      %c0_13 = arith.constant 0 : index
      %17 = vector.load %arg3[%c0_12, %c0_13] : memref<8x128xf32, #tpu.memory_space<vmem>>, vector<8x128xf32>
      %c0_14 = arith.constant 0 : index
      %c0_15 = arith.constant 0 : index
      %18 = vector.load %arg4[%c0_14, %c0_15] : memref<128x128xf32, #tpu.memory_space<vmem>>, vector<128x128xf32>
      %cst_16 = arith.constant dense<0.000000e+00> : vector<8x128xf32>
      %19 = tpu.matmul %17, %18, %cst_16 {dimension_numbers = #tpu.dot_dimension_numbers<[1], [0], [0], [1], [0, 0, 1, 1], [], []>} : vector<8x128xf32>, vector<128x128xf32>, vector<8x128xf32> -> vector<8x128xf32>
      %c0_17 = arith.constant 0 : index
      %c0_18 = arith.constant 0 : index
      %20 = vector.load %arg5[%c0_17, %c0_18] : memref<1x128xf32, #tpu.memory_space<vmem>>, vector<1x128xf32>
      %21 = vector.broadcast %20 : vector<1x128xf32> to vector<8x128xf32>
      %22 = arith.addf %19, %21 : vector<8x128xf32>
      %cst_19 = arith.constant 5.000000e-01 : f32
      %23 = vector.broadcast %cst_19 : f32 to vector<8x128xf32>
      %24 = arith.mulf %23, %22 : vector<8x128xf32>
      %cst_20 = arith.constant 0.707106769 : f32
      %25 = vector.broadcast %cst_20 : f32 to vector<8x128xf32>
      %26 = arith.mulf %22, %25 : vector<8x128xf32>
      %27 = math.erf %26 : vector<8x128xf32>
      %cst_21 = arith.constant 1.000000e+00 : f32
      %28 = vector.broadcast %cst_21 : f32 to vector<8x128xf32>
      %29 = arith.addf %28, %27 : vector<8x128xf32>
      %30 = arith.mulf %24, %29 : vector<8x128xf32>
      %31 = arith.index_cast %arg2 : i32 to index
      %c0_22 = arith.constant 0 : index
      %c0_23 = arith.constant 0 : index
      %32 = vector.load %arg10[%31, %c0_22, %c0_23] : memref<1x8x128xf32, #tpu.memory_space<vmem>>, vector<1x8x128xf32>
      %33 = vector.shape_cast %32 : vector<1x8x128xf32> to vector<8x128xf32>
      %34 = vector.shape_cast %30 : vector<8x128xf32> to vector<1x8x128xf32>
      tpu.vector_store %arg10[%31, %c0_22, %c0_23], %34 {strides = array<i32>} : memref<1x8x128xf32, #tpu.memory_space<vmem>>, vector<1x8x128xf32>,
    } else {
    }
    %c0 = arith.constant 0 : index
    %c0_3 = arith.constant 0 : index
    %6 = vector.load %arg9[%c0, %c0_3] : memref<8x128xf32, #tpu.memory_space<vmem>>, vector<8x128xf32>
    %7 = arith.index_cast %arg2 : i32 to index
    %c0_4 = arith.constant 0 : index
    %c0_5 = arith.constant 0 : index
    %8 = vector.load %arg10[%7, %c0_4, %c0_5] : memref<1x8x128xf32, #tpu.memory_space<vmem>>, vector<1x8x128xf32>
    %9 = vector.shape_cast %8 : vector<1x8x128xf32> to vector<8x128xf32>
    %c0_6 = arith.constant 0 : index
    %c0_7 = arith.constant 0 : index
    %10 = vector.load %arg6[%c0_6, %c0_7] : memref<128x128xf32, #tpu.memory_space<vmem>>, vector<128x128xf32>
    %cst = arith.constant dense<0.000000e+00> : vector<8x128xf32>
    %11 = tpu.matmul %9, %10, %cst {dimension_numbers = #tpu.dot_dimension_numbers<[1], [0], [0], [1], [0, 0, 1, 1], [], []>} : vector<8x128xf32>, vector<128x128xf32>, vector<8x128xf32> -> vector<8x128xf32>
    %12 = arith.addf %6, %11 : vector<8x128xf32>
    %c0_8 = arith.constant 0 : index
    %c0_9 = arith.constant 0 : index
    %13 = vector.load %arg9[%c0_8, %c0_9] : memref<8x128xf32, #tpu.memory_space<vmem>>, vector<8x128xf32>
    tpu.vector_store %arg9[%c0_8, %c0_9], %12 {strides = array<i32>} : memref<8x128xf32, #tpu.memory_space<vmem>>, vector<8x128xf32>,
    %c0_i32_10 = arith.constant 0 : i32
    %14 = arith.cmpi eq, %arg2, %c0_i32_10 : i32
    %15 = arith.extui %14 : i1 to i32
    %c0_i32_11 = arith.constant 0 : i32
    %16 = arith.cmpi ne, %15, %c0_i32_11 : i32
    scf.if %16 {
      %c0_12 = arith.constant 0 : index
      %c0_13 = arith.constant 0 : index
      %17 = vector.load %arg9[%c0_12, %c0_13] : memref<8x128xf32, #tpu.memory_space<vmem>>, vector<8x128xf32>
      %c0_14 = arith.constant 0 : index
      %c0_15 = arith.constant 0 : index
      %18 = vector.load %arg7[%c0_14, %c0_15] : memref<1x128xf32, #tpu.memory_space<vmem>>, vector<1x128xf32>
      %19 = vector.broadcast %18 : vector<1x128xf32> to vector<8x128xf32>
      %20 = arith.addf %17, %19 : vector<8x128xf32>
      %c0_16 = arith.constant 0 : index
      %c0_17 = arith.constant 0 : index
      %21 = vector.load %arg8[%c0_16, %c0_17] : memref<8x128xf32, #tpu.memory_space<vmem>>, vector<8x128xf32>
      tpu.vector_store %arg8[%c0_16, %c0_17], %20 {strides = array<i32>} : memref<8x128xf32, #tpu.memory_space<vmem>>, vector<8x128xf32>,
    } else {
    }
    return
  }
  func.func @transform_0(%arg0: i32, %arg1: i32, %arg2: i32) -> (i32, i32) {
    %c0_i32 = arith.constant 0 : i32
    %c0_i32_0 = arith.constant 0 : i32
    return %arg0, %c0_i32 : i32, i32
  }
  func.func @transform_1(%arg0: i32, %arg1: i32, %arg2: i32) -> (i32, i32) {
    %c0_i32 = arith.constant 0 : i32
    %0 = arith.cmpi eq, %arg1, %c0_i32 : i32
    %c0_i32_0 = arith.constant 0 : i32
    %1 = arith.select %0, %arg2, %c0_i32_0 : i32
    %c0_i32_1 = arith.constant 0 : i32
    %c0_i32_2 = arith.constant 0 : i32
    return %c0_i32_1, %1 : i32, i32
  }
  func.func @transform_2(%arg0: i32, %arg1: i32, %arg2: i32) -> (i32, i32) {
    %c0_i32 = arith.constant 0 : i32
    %0 = arith.cmpi eq, %arg1, %c0_i32 : i32
    %c0_i32_0 = arith.constant 0 : i32
    %1 = arith.select %0, %arg2, %c0_i32_0 : i32
    %c0_i32_1 = arith.constant 0 : i32
    %c0_i32_2 = arith.constant 0 : i32
    return %c0_i32_1, %1 : i32, i32
  }
  func.func @transform_3(%arg0: i32, %arg1: i32, %arg2: i32) -> (i32, i32) {
    %c0_i32 = arith.constant 0 : i32
    return %arg2, %arg1 : i32, i32
  }
  func.func @transform_4(%arg0: i32, %arg1: i32, %arg2: i32) -> (i32, i32) {
    %c0_i32 = arith.constant 0 : i32
    %c0_i32_0 = arith.constant 0 : i32
    return %c0_i32, %arg1 : i32, i32
  }
  func.func @transform_5(%arg0: i32, %arg1: i32, %arg2: i32) -> (i32, i32) {
    %c0_i32 = arith.constant 0 : i32
    return %arg0, %arg1 : i32, i32
  }
}

</mosaic_0001>

<llo_original>
// kernel: tpu_custom_call.1
$region0: #{tpu_custom_call.1}
  #allocation0 [shape = 'u32[]', space=smem, size = 0x4, offset = 0x4, fixed_abs, tag = 'smem constant byte address 0x4 - core index']
  #allocation1 [shape = 'u32[144,128]{1,0:T(1,128)}', space=vmem, size = 0x12000, scoped, tag = 'internal scratch']
  #allocation2 [shape = 'f32[8,128]{1,0:T(8,128)}', space=vmem, size = 0x1000, scoped, tag = 'scratch operand']
  #allocation3 [shape = 'f32[1,8,128]{2,1,0:T(8,128)}', space=vmem, size = 0x1000, scoped, tag = 'scratch operand']
  %s0 = inlined_call_operand.hbm [shape: f32[16,128], index: 0, kind: input, shape index: {}]
  %s1 = inlined_call_operand.hbm [shape: f32[128,128], index: 1, kind: input, shape index: {}]
  %s2 = inlined_call_operand.vmem [shape: f32[1,128], index: 2, kind: input, shape index: {}]
  %s3 = inlined_call_operand.hbm [shape: f32[128,128], index: 3, kind: input, shape index: {}]
  %s4 = inlined_call_operand.vmem [shape: f32[1,128], index: 4, kind: input, shape index: {}]
  %s5 = inlined_call_operand.hbm [shape: f32[16,128], index: 5, kind: output, shape index: {}]
  %s6 = sld [smem:[#allocation0]]
  $region77: #{tpu_custom_call.1} parent=0
    _
  %s8 = ssub.s32 1, %s6
  %s9 = scalar_select 0, %s8, %s6
  $region1: #{tpu_custom_call.1} parent=0
    #allocation4 [shape = 'u8[8192]{0}', space=vmem, size = 0x2000, scoped, tag = 'input window, operand 0']
    #allocation5 [shape = 's32[2]{0}', space=sflag, size = 0x8, scoped, tag = 'scoped memory for tpu_custom_call.1']
    #allocation6 [shape = 's32[2]{0}', space=sflag, size = 0x8, scoped, tag = 'scoped memory for tpu_custom_call.1']
    #allocation7 [shape = 'u8[65536]{0}', space=vmem, size = 0x10000, scoped, tag = 'input window, operand 1, single buffered']
    #allocation8 [shape = 's32[1]{0}', space=sflag, size = 0x4, scoped, tag = 'scoped memory for tpu_custom_call.1']
    #allocation9 [shape = 'u8[65536]{0}', space=vmem, size = 0x10000, scoped, tag = 'input window, operand 3, single buffered']
    #allocation10 [shape = 'u8[8192]{0}', space=vmem, size = 0x2000, scoped, tag = 'output window, operand 0']
    %10 = vsyncpa [#allocation5], 0
    %s11 = scalar_lea.sflag [#allocation5], 1
    %12 = vsyncpa %s11, 0
    %13 = vsyncpa [#allocation8], 0
    %14 = vsyncpa [#allocation6], 0
    %s15 = scalar_lea.sflag [#allocation6], 1
    %16 = vsyncpa %s15, 0
    loop: start=0, step=1, limit=4
    $region2: #{tpu_custom_call.1} parent=1 // loop_pre_header
      _
    $region3: #{tpu_custom_call.1} parent=1 // loop_header
      %s18 = sphi 0, %s22
      %p19 = scmp.ge.s32.totalorder %s18, 4
      %s25 = sphi 0, %s44
      %s26 = sphi 0, %s40
      %s27 = sphi 0, %s36
      %s28 = sphi 0, %s25
      %s29 = sphi 0, %s26
      %s30 = sphi 0, %s27
      %s31 = sphi 0, %s28
      %s32 = sphi 0, %s29
      %s33 = sphi 0, %s30
      %s47 = sphi 0, %s49
      %s50 = sphi 0, %s47
      %s51 = sphi 0, %s50
      %s67 = sphi 0, %s51
      %s77 = sphi 0, %s79
      %s80 = sphi 0, %s77
      %s81 = sphi 0, %s80
      %s97 = sphi 0, %s81
      %s107 = sphi 0, %s109
      %s110 = sphi 0, %s107
      %s111 = sphi 0, %s110
      %s127 = sphi 0, %s111
      %s135 = sphi 0, %s137
      %s138 = sphi 0, %s135
      %s139 = sphi 0, %s138
      %s155 = sphi 0, %s139
      %s161 = sphi 0, %s163
      %s164 = sphi 0, %s161
      %s165 = sphi 0, %s164
      %s181 = sphi 0, %s165
      %s189 = sphi 0, %s191
      %s192 = sphi 0, %s189
      %s193 = sphi 0, %s192
      %s209 = sphi 0, %s193
    $region4: #{tpu_custom_call.1} parent=1 // loop_header_branch
      %21 = sbr.rel (%p19) target = $region8
    $region5: #{tpu_custom_call.1} parent=1 // loop_body
      %s23 = ssub.s32 %s18, 1
      %s24 = ssub.s32 %s18, 2
      %s34 = sadd.s32 1, %s27
      %p35 = scmp.ge.s32.totalorder %s34, 1
      %s36 = scalar_select %p35, 0, %s34
      %s37 = sadd.s32 1, %s26
      %s38 = scalar_select %p35, %s37, %s26
      %p39 = scmp.ge.s32.totalorder %s38, 1
      %s40 = scalar_select %p39, 0, %s38
      %s41 = sadd.s32 1, %s25
      %s42 = scalar_select %p39, %s41, %s25
      %p43 = scmp.ge.s32.totalorder %s42, 2
      %s44 = scalar_select %p43, 0, %s42
      %s45 = ssub.s32 %s25, %s44
      %p46 = scmp.eq.s32.totalorder %s45, 0
      %s48 = sadd.s32 %s47, 1
      %s49 = scalar_select %p46, %s47, %s48
      %p52 = pneg %p46
      %p53 = scmp.eq.s32.totalorder %s18, 1
      %p54 = por %p52, %p53
      %p55 = scmp.ne.s32.totalorder %s47, %s50
      %p56 = scmp.eq.s32.totalorder %s18, 0
      %p57 = por %p55, %p56
      %p58 = scmp.ne.s32.totalorder %s47, %s50
      %p59 = scmp.eq.s32.totalorder %s23, 1
      %p60 = por %p58, %p59
      %p61 = scmp.ne.s32.totalorder %s50, %s51
      %p62 = scmp.eq.s32.totalorder %s23, 0
      %p63 = por %p61, %p62
      %p64 = scmp.ne.s32.totalorder %s50, %s51
      %p65 = scmp.eq.s32.totalorder %s24, 1
      %p66 = por %p64, %p65
      %p68 = scmp.ne.s32.totalorder %s51, %s67
      %p69 = scmp.eq.s32.totalorder %s24, 0
      %p70 = por %p68, %p69
      %p71 = scmp.eq.s32.totalorder %s26, 0
      %s72 = scalar_select %p71, %s27, 0
      %p73 = scmp.eq.s32.totalorder %s40, 0
      %s74 = scalar_select %p73, %s36, 0
      %s75 = ssub.s32 %s72, %s74
      %p76 = scmp.eq.s32.totalorder %s75, 0
      %s78 = sadd.s32 %s77, 1
      %s79 = scalar_select %p76, %s77, %s78
      %p82 = pneg %p76
      %p83 = scmp.eq.s32.totalorder %s18, 1
      %p84 = por %p82, %p83
      %p85 = scmp.ne.s32.totalorder %s77, %s80
      %p86 = scmp.eq.s32.totalorder %s18, 0
      %p87 = por %p85, %p86
      %p88 = scmp.ne.s32.totalorder %s77, %s80
      %p89 = scmp.eq.s32.totalorder %s23, 1
      %p90 = por %p88, %p89
      %p91 = scmp.ne.s32.totalorder %s80, %s81
      %p92 = scmp.eq.s32.totalorder %s23, 0
      %p93 = por %p91, %p92
      %p94 = scmp.ne.s32.totalorder %s80, %s81
      %p95 = scmp.eq.s32.totalorder %s24, 1
      %p96 = por %p94, %p95
      %p98 = scmp.ne.s32.totalorder %s81, %s97
      %p99 = scmp.eq.s32.totalorder %s24, 0
      %p100 = por %p98, %p99
      %p101 = scmp.eq.s32.totalorder %s26, 0
      %s102 = scalar_select %p101, %s27, 0
      %p103 = scmp.eq.s32.totalorder %s40, 0
      %s104 = scalar_select %p103, %s36, 0
      %s105 = ssub.s32 %s102, %s104
      %p106 = scmp.eq.s32.totalorder %s105, 0
      %s108 = sadd.s32 %s107, 1
      %s109 = scalar_select %p106, %s107, %s108
      %p112 = pneg %p106
      %p113 = scmp.eq.s32.totalorder %s18, 1
      %p114 = por %p112, %p113
      %p115 = scmp.ne.s32.totalorder %s107, %s110
      %p116 = scmp.eq.s32.totalorder %s18, 0
      %p117 = por %p115, %p116
      %p118 = scmp.ne.s32.totalorder %s107, %s110
      %p119 = scmp.eq.s32.totalorder %s23, 1
      %p120 = por %p118, %p119
      %p121 = scmp.ne.s32.totalorder %s110, %s111
      %p122 = scmp.eq.s32.totalorder %s23, 0
      %p123 = por %p121, %p122
      %p124 = scmp.ne.s32.totalorder %s110, %s111
      %p125 = scmp.eq.s32.totalorder %s24, 1
      %p126 = por %p124, %p125
      %p128 = scmp.ne.s32.totalorder %s111, %s127
      %p129 = scmp.eq.s32.totalorder %s24, 0
      %p130 = por %p128, %p129
      %s131 = ssub.s32 %s27, %s36
      %s132 = ssub.s32 %s26, %s40
      %s133 = sor.u32 %s131, %s132
      %p134 = scmp.eq.s32.totalorder %s133, 0
      %s136 = sadd.s32 %s135, 1
      %s137 = scalar_select %p134, %s135, %s136
      %p140 = pneg %p134
      %p141 = scmp.eq.s32.totalorder %s18, 1
      %p142 = por %p140, %p141
      %p143 = scmp.ne.s32.totalorder %s135, %s138
      %p144 = scmp.eq.s32.totalorder %s18, 0
      %p145 = por %p143, %p144
      %p146 = scmp.ne.s32.totalorder %s135, %s138
      %p147 = scmp.eq.s32.totalorder %s23, 1
      %p148 = por %p146, %p147
      %p149 = scmp.ne.s32.totalorder %s138, %s139
      %p150 = scmp.eq.s32.totalorder %s23, 0
      %p151 = por %p149, %p150
      %p152 = scmp.ne.s32.totalorder %s138, %s139
      %p153 = scmp.eq.s32.totalorder %s24, 1
      %p154 = por %p152, %p153
      %p156 = scmp.ne.s32.totalorder %s139, %s155
      %p157 = scmp.eq.s32.totalorder %s24, 0
      %p158 = por %p156, %p157
      %s159 = ssub.s32 %s26, %s40
      %p160 = scmp.eq.s32.totalorder %s159, 0
      %s162 = sadd.s32 %s161, 1
      %s163 = scalar_select %p160, %s161, %s162
      %p166 = pneg %p160
      %p167 = scmp.eq.s32.totalorder %s18, 1
      %p168 = por %p166, %p167
      %p169 = scmp.ne.s32.totalorder %s161, %s164
      %p170 = scmp.eq.s32.totalorder %s18, 0
      %p171 = por %p169, %p170
      %p172 = scmp.ne.s32.totalorder %s161, %s164
      %p173 = scmp.eq.s32.totalorder %s23, 1
      %p174 = por %p172, %p173
      %p175 = scmp.ne.s32.totalorder %s164, %s165
      %p176 = scmp.eq.s32.totalorder %s23, 0
      %p177 = por %p175, %p176
      %p178 = scmp.ne.s32.totalorder %s164, %s165
      %p179 = scmp.eq.s32.totalorder %s24, 1
      %p180 = por %p178, %p179
      %p182 = scmp.ne.s32.totalorder %s165, %s181
      %p183 = scmp.eq.s32.totalorder %s24, 0
      %p184 = por %p182, %p183
      %s185 = ssub.s32 %s25, %s44
      %s186 = ssub.s32 %s26, %s40
      %s187 = sor.u32 %s185, %s186
      %p188 = scmp.eq.s32.totalorder %s187, 0
      %s190 = sadd.s32 %s189, 1
      %s191 = scalar_select %p188, %s189, %s190
      %p194 = pneg %p188
      %p195 = scmp.eq.s32.totalorder %s18, 1
      %p196 = por %p194, %p195
      %p197 = scmp.ne.s32.totalorder %s189, %s192
      %p198 = scmp.eq.s32.totalorder %s18, 0
      %p199 = por %p197, %p198
      %p200 = scmp.ne.s32.totalorder %s189, %s192
      %p201 = scmp.eq.s32.totalorder %s23, 1
      %p202 = por %p200, %p201
      %p203 = scmp.ne.s32.totalorder %s192, %s193
      %p204 = scmp.eq.s32.totalorder %s23, 0
      %p205 = por %p203, %p204
      %p206 = scmp.ne.s32.totalorder %s192, %s193
      %p207 = scmp.eq.s32.totalorder %s24, 1
      %p208 = por %p206, %p207
      %p210 = scmp.ne.s32.totalorder %s193, %s209
      %p211 = scmp.eq.s32.totalorder %s24, 0
      %p212 = por %p210, %p211
      %p213 = scmp.le.s32.totalorder 1, %s18
      %p214 = scmp.lt.s32.totalorder %s18, 3
      %p215 = pnand %p213, %p214
      %p216 = pneg %p215
      // Predicated region
      $region9: #{tpu_custom_call.1} parent=5 // pred_check
        _
      $region10: #{tpu_custom_call.1} parent=5 // pred_check_branch
        %218 = sbr.rel (%p215) target = $region12
      $region11: #{tpu_custom_call.1} parent=5 // pred_region
        %s219 = ssub.s32 %s18, 1
        // Predicated region
        $region13: #{tpu_custom_call.1} parent=11 // pred_check
          %p220 = pneg %p93
        $region14: #{tpu_custom_call.1} parent=11 // pred_check_branch
          %222 = sbr.rel (%p220) target = $region16
        $region15: #{tpu_custom_call.1} parent=11 // pred_region
          %p223 = scmp.eq.s32.totalorder %s29, 0
          %s224 = scalar_select %p223, %s30, 0
          %s226 = ssub.s32 2048, 2048
          %227 = vsyncadd [#allocation8], %s226
          %s228 = smul.addr %s224, 128
          %s229 = scalar_lea.hbm %s1, %s228
          %s230 = sshll.u32 [#allocation7], 4
          %s231 = int_to_ptr.vmem [resolvable:$true] %s230
          %236 = dma.hbm_to_vmem [thread:$0]  %s229, 2048, %s231, [#allocation8], 128, 128, 8
        $region16: #{tpu_custom_call.1} parent=11 // pred_fallthru
          _
        // Predicated region
        $region17: #{tpu_custom_call.1} parent=11 // pred_check
          %p237 = pneg %p123
        $region18: #{tpu_custom_call.1} parent=11 // pred_check_branch
          %239 = sbr.rel (%p237) target = $region20
        $region19: #{tpu_custom_call.1} parent=11 // pred_region
          %p240 = scmp.eq.s32.totalorder %s29, 0
          %s241 = scalar_select %p240, %s30, 0
          %p242 = scmp.lt.s32.totalorder %s241, 0
          %s243 = scalar_select %p242, %s241, 0
          %s244 = scalar_lea.vmem %s2, %s243
          %p245 = scmp.eq.s32.totalorder %s29, 0
          %s246 = scalar_select %p245, %s30, 0
        $region20: #{tpu_custom_call.1} parent=11 // pred_fallthru
          _
        // Predicated region
        $region21: #{tpu_custom_call.1} parent=11 // pred_check
          %p247 = pneg %p151
        $region22: #{tpu_custom_call.1} parent=11 // pred_check_branch
          %249 = sbr.rel (%p247) target = $region24
        $region23: #{tpu_custom_call.1} parent=11 // pred_region
          %s250 = smul.u32 16, %s30
          %s252 = ssub.s32 2048, 2048
          %253 = vsyncadd [#allocation8], %s252
          %s254 = sadd.s32 %s29, %s250
          %s255 = smul.addr %s254, 128
          %s256 = scalar_lea.hbm %s3, %s255
          %s257 = sshll.u32 [#allocation9], 4
          %s258 = int_to_ptr.vmem [resolvable:$true] %s257
          %263 = dma.hbm_to_vmem [thread:$0]  %s256, 2048, %s258, [#allocation8], 128, 128, 8
        $region24: #{tpu_custom_call.1} parent=11 // pred_fallthru
          _
        // Predicated region
        $region25: #{tpu_custom_call.1} parent=11 // pred_check
          %p264 = pneg %p177
        $region26: #{tpu_custom_call.1} parent=11 // pred_check_branch
          %266 = sbr.rel (%p264) target = $region28
        $region27: #{tpu_custom_call.1} parent=11 // pred_region
          %p267 = scmp.lt.s32.totalorder %s29, 0
          %s268 = scalar_select %p267, %s29, 0
          %s269 = scalar_lea.vmem %s4, %s268
        $region28: #{tpu_custom_call.1} parent=11 // pred_fallthru
          _
      $region12: #{tpu_custom_call.1} parent=5 // pred_fallthru
        _
      %p270 = scmp.lt.s32.totalorder %s18, 2
      // Predicated region
      $region29: #{tpu_custom_call.1} parent=5 // pred_check
        %p271 = pneg %p270
      $region30: #{tpu_custom_call.1} parent=5 // pred_check_branch
        %273 = sbr.rel (%p271) target = $region32
      $region31: #{tpu_custom_call.1} parent=5 // pred_region
        // Predicated region
        $region33: #{tpu_custom_call.1} parent=31 // pred_check
          %p274 = pneg %p57
        $region34: #{tpu_custom_call.1} parent=31 // pred_check_branch
          %276 = sbr.rel (%p274) target = $region36
        $region35: #{tpu_custom_call.1} parent=31 // pred_region
          %s277 = sand.u32 %s47, 1
          %s278 = scalar_lea.sflag [#allocation5], %s277
          %s279 = sand.u32 %s47, 1
          %s280 = smul.addr %s279, 8
          %s281 = scalar_lea.vmem [#allocation4], %s280
          %s283 = ssub.s32 128, 128
          %284 = vsyncadd %s278, %s283
          %s285 = smul.addr %s25, 128
          %s286 = scalar_lea.hbm %s0, %s285
          %s288 = sshll.u32 %s281, 4
          %s289 = int_to_ptr.vmem [resolvable:$true] %s288
          %291 = dma.hbm_to_vmem [thread:$0]  %s286, 128, %s289, %s278
        $region36: #{tpu_custom_call.1} parent=31 // pred_fallthru
          _
      $region32: #{tpu_custom_call.1} parent=5 // pred_fallthru
        _
      %p292 = scmp.le.s32.totalorder 1, %s18
      %p293 = scmp.lt.s32.totalorder %s18, 3
      %p294 = pnand %p292, %p293
      %p295 = pneg %p294
      // Predicated region
      $region37: #{tpu_custom_call.1} parent=5 // pred_check
        _
      $region38: #{tpu_custom_call.1} parent=5 // pred_check_branch
        %297 = sbr.rel (%p294) target = $region40
      $region39: #{tpu_custom_call.1} parent=5 // pred_region
        %s298 = ssub.s32 %s18, 1
        %s299 = sand.u32 %s50, 1
        %s300 = scalar_lea.sflag [#allocation5], %s299
        %s301 = sand.u32 %s50, 1
        %s302 = smul.addr %s301, 8
        %s303 = scalar_lea.vmem [#allocation4], %s302
        // Predicated region
        $region41: #{tpu_custom_call.1} parent=39 // pred_check
          %p304 = pneg %p63
        $region42: #{tpu_custom_call.1} parent=39 // pred_check_branch
          %306 = sbr.rel (%p304) target = $region44
        $region43: #{tpu_custom_call.1} parent=39 // pred_region
          %307 = dma.done %s300, 128
        $region44: #{tpu_custom_call.1} parent=39 // pred_fallthru
          _
        // Predicated region
        $region45: #{tpu_custom_call.1} parent=39 // pred_check
          %p308 = pneg %p93
        $region46: #{tpu_custom_call.1} parent=39 // pred_check_branch
          %310 = sbr.rel (%p308) target = $region48
        $region47: #{tpu_custom_call.1} parent=39 // pred_region
          %311 = dma.done [#allocation8], 2048
        $region48: #{tpu_custom_call.1} parent=39 // pred_fallthru
          _
        // Predicated region
        $region49: #{tpu_custom_call.1} parent=39 // pred_check
          %p312 = pneg %p151
        $region50: #{tpu_custom_call.1} parent=39 // pred_check_branch
          %314 = sbr.rel (%p312) target = $region52
        $region51: #{tpu_custom_call.1} parent=39 // pred_region
          %315 = dma.done [#allocation8], 2048
        $region52: #{tpu_custom_call.1} parent=39 // pred_fallthru
          _
        %s316 = sand.u32 %s50, 1
        %s317 = scalar_lea.sflag [#allocation5], %s316
        %s318 = sand.u32 %s50, 1
        %s319 = smul.addr %s318, 8
        %s320 = scalar_lea.vmem [#allocation4], %s319
        %p321 = pneg %p63
        %p322 = pneg %p60
        %p323 = pneg %p93
        %p324 = pneg %p90
        %p325 = scmp.eq.s32.totalorder %s29, 0
        %s326 = scalar_select %p325, %s30, 0
        %p327 = scmp.lt.s32.totalorder %s326, 0
        %s328 = scalar_select %p327, %s326, 0
        %s329 = scalar_lea.vmem %s2, %s328
        %p330 = pneg %p123
        %p331 = pneg %p120
        %p332 = pneg %p151
        %p333 = pneg %p148
        %p334 = scmp.lt.s32.totalorder %s29, 0
        %s335 = scalar_select %p334, %s29, 0
        %s336 = scalar_lea.vmem %s4, %s335
        %p337 = pneg %p177
        %p338 = pneg %p174
        %p339 = pneg %p205
        %p340 = pneg %p202
        %s341 = sand.u32 %s192, 1
        %s342 = scalar_lea.sflag [#allocation6], %s341
        %s343 = sand.u32 %s192, 1
        %s344 = smul.addr %s343, 8
        %s345 = scalar_lea.vmem [#allocation10], %s344
        %p346 = scmp.eq.s32.totalorder %s29, 0
        %s347 = scalar_select %p346, %s30, 0
        %p348 = scmp.eq.s32.totalorder %s29, 0
        %s349 = scalar_select %p348, %s30, 0
        %p350 = scmp.lt.s32.totalorder %s349, 0
        %s351 = scalar_select %p350, %s349, 0
        %s352 = scalar_lea.vmem %s2, %s351
        %p353 = scmp.eq.s32.totalorder %s29, 0
        %s354 = scalar_select %p353, %s30, 0
        %s355 = smul.u32 16, %s30
        %p356 = scmp.lt.s32.totalorder %s29, 0
        %s357 = scalar_select %p356, %s29, 0
        %s358 = scalar_lea.vmem %s4, %s357
        %p359 = scmp.eq.s32.totalorder %s30, 0
        // Predicated region
        $region53: #{tpu_custom_call.1} parent=39 // pred_check
          %p360 = pneg %p359
        $region54: #{tpu_custom_call.1} parent=39 // pred_check_branch
          %362 = sbr.rel (%p360) target = $region56
        $region55: #{tpu_custom_call.1} parent=39 // pred_region
          %363 = vst [vmem:[#allocation2] sm:$0xff] 0.0
        $region56: #{tpu_custom_call.1} parent=39 // pred_fallthru
          _
        %p364 = scmp.eq.s32.totalorder %s29, 0
        // Predicated region
        $region57: #{tpu_custom_call.1} parent=39 // pred_check
          %p365 = pneg %p364
        $region58: #{tpu_custom_call.1} parent=39 // pred_check_branch
          %367 = sbr.rel (%p365) target = $region60
        $region59: #{tpu_custom_call.1} parent=39 // pred_region
          %v368 = vld [vmem:[%s303] sm:$0xff]
          %v369 = vld [vmem:[#allocation7] sm:$0xff]
          %v370 = vld [vmem:[#allocation7 + $0x8] sm:$0xff]
          %v371 = vld [vmem:[#allocation7 + $0x10] sm:$0xff]
          %v372 = vld [vmem:[#allocation7 + $0x18] sm:$0xff]
          %v373 = vld [vmem:[#allocation7 + $0x20] sm:$0xff]
          %v374 = vld [vmem:[#allocation7 + $0x28] sm:$0xff]
          %v375 = vld [vmem:[#allocation7 + $0x30] sm:$0xff]
          %v376 = vld [vmem:[#allocation7 + $0x38] sm:$0xff]
          %v377 = vld [vmem:[#allocation7 + $0x40] sm:$0xff]
          %v378 = vld [vmem:[#allocation7 + $0x48] sm:$0xff]
          %v379 = vld [vmem:[#allocation7 + $0x50] sm:$0xff]
          %v380 = vld [vmem:[#allocation7 + $0x58] sm:$0xff]
          %v381 = vld [vmem:[#allocation7 + $0x60] sm:$0xff]
          %v382 = vld [vmem:[#allocation7 + $0x68] sm:$0xff]
          %v383 = vld [vmem:[#allocation7 + $0x70] sm:$0xff]
          %v384 = vld [vmem:[#allocation7 + $0x78] sm:$0xff]
          %v385 = vld [vmem:[%s352] sm:$0x1]
          %v387 = vlaneseq
          %v388 = vshrl.u32 %v387, 7
          %v389 = vsub.s32 0, %v388
          %v390 = vrot.slane %v385, %v389
          %392 = vmatprep.subr.mxu0 0.0
          %393 = vmatpush1.msra.mxu0 %v384
          %394 = vmatprep.subr.mxu0 0.0
          %395 = vmatpush1.msra.mxu0 %v383
          %396 = vmatprep.subr.mxu0 0.0
          %397 = vmatpush1.msra.mxu0 %v382
          %398 = vmatprep.subr.mxu0 0.0
          %399 = vmatpush1.msra.mxu0 %v381
          %400 = vmatprep.subr.mxu0 0.0
          %401 = vmatpush1.msra.mxu0 %v380
          %402 = vmatprep.subr.mxu0 0.0
          %403 = vmatpush1.msra.mxu0 %v379
          %404 = vmatprep.subr.mxu0 0.0
          %405 = vmatpush1.msra.mxu0 %v378
          %406 = vmatprep.subr.mxu0 0.0
          %407 = vmatpush1.msra.mxu0 %v377
          %408 = vmatprep.subr.mxu0 0.0
          %409 = vmatpush1.msra.mxu0 %v376
          %410 = vmatprep.subr.mxu0 0.0
          %411 = vmatpush1.msra.mxu0 %v375
          %412 = vmatprep.subr.mxu0 0.0
          %413 = vmatpush1.msra.mxu0 %v374
          %414 = vmatprep.subr.mxu0 0.0
          %415 = vmatpush1.msra.mxu0 %v373
          %416 = vmatprep.subr.mxu0 0.0
          %417 = vmatpush1.msra.mxu0 %v372
          %418 = vmatprep.subr.mxu0 0.0
          %419 = vmatpush1.msra.mxu0 %v371
          %420 = vmatprep.subr.mxu0 0.0
          %421 = vmatpush1.msra.mxu0 %v370
          %422 = vmatprep.subr.mxu0 0.0
          %423 = vmatpush1.msra.mxu0 %v369
          %424 = vmatprep.subr.mxu0 0.0
          %425 = vmatpush2.msra.mxu0 0.0
          %426 = vmatprep.subr.mxu0 0.0
          %427 = vmatpush2.msra.mxu0 0.0
          %428 = vmatprep.subr.mxu0 0.0
          %429 = vmatpush2.msra.mxu0 0.0
          %430 = vmatprep.subr.mxu0 0.0
          %431 = vmatpush2.msra.mxu0 0.0
          %432 = vmatprep.subr.mxu0 0.0
          %433 = vmatpush2.msra.mxu0 0.0
          %434 = vmatprep.subr.mxu0 0.0
          %435 = vmatpush2.msra.mxu0 0.0
          %436 = vmatprep.subr.mxu0 0.0
          %437 = vmatpush2.msra.mxu0 0.0
          %438 = vmatprep.subr.mxu0 0.0
          %439 = vmatpush2.msra.mxu0 0.0
          %440 = vmatprep.subr.mxu0 0.0
          %441 = vmatpush2.msra.mxu0 0.0
          %442 = vmatprep.subr.mxu0 0.0
          %443 = vmatpush2.msra.mxu0 0.0
          %444 = vmatprep.subr.mxu0 0.0
          %445 = vmatpush2.msra.mxu0 0.0
          %446 = vmatprep.subr.mxu0 0.0
          %447 = vmatpush2.msra.mxu0 0.0
          %448 = vmatprep.subr.mxu0 0.0
          %449 = vmatpush2.msra.mxu0 0.0
          %450 = vmatprep.subr.mxu0 0.0
          %451 = vmatpush2.msra.mxu0 0.0
          %452 = vmatprep.subr.mxu0 0.0
          %453 = vmatpush2.msra.mxu0 0.0
          %454 = vmatprep.subr.mxu0 0.0
          %455 = vmatpush2.msra.mxu0 0.0
          %456 = vmatprep.mubr.f32.mxu0 0.0
          %457 = vmatmul.mubr.f32.gmra.mxu0 %v368
          %v458 = vpop.f32.mrf.mxu0
          %v459 = vadd.f32 %v390, %v458
          %v460 = vpop.f32.mrf.mxu0
          %461 = vdwg.mxu0
          %v462 = vmul.f32 %v459, 0.5
          %v463 = vmul.f32 %v459, 0.70710677
          %v464 = verf.f32.pop %v463
          %v465 = vadd.f32 %v464, 1.0
          %v466 = vmul.f32 %v462, %v465
          %s467 = smul.u32 %s30, 8
          %s468 = scalar_lea.vmem [#allocation3], %s467
          %469 = vst [vmem:[%s468] sm:$0xff] %v466
        $region60: #{tpu_custom_call.1} parent=39 // pred_fallthru
          _
        %v470 = vld [vmem:[#allocation2] sm:$0xff]
        %s471 = smul.u32 %s30, 8
        %s472 = scalar_lea.vmem [#allocation3], %s471
        %v473 = vld [vmem:[%s472] sm:$0xff]
        %v474 = vld [vmem:[#allocation9] sm:$0xff]
        %v475 = vld [vmem:[#allocation9 + $0x8] sm:$0xff]
        %v476 = vld [vmem:[#allocation9 + $0x10] sm:$0xff]
        %v477 = vld [vmem:[#allocation9 + $0x18] sm:$0xff]
        %v478 = vld [vmem:[#allocation9 + $0x20] sm:$0xff]
        %v479 = vld [vmem:[#allocation9 + $0x28] sm:$0xff]
        %v480 = vld [vmem:[#allocation9 + $0x30] sm:$0xff]
        %v481 = vld [vmem:[#allocation9 + $0x38] sm:$0xff]
        %v482 = vld [vmem:[#allocation9 + $0x40] sm:$0xff]
        %v483 = vld [vmem:[#allocation9 + $0x48] sm:$0xff]
        %v484 = vld [vmem:[#allocation9 + $0x50] sm:$0xff]
        %v485 = vld [vmem:[#allocation9 + $0x58] sm:$0xff]
        %v486 = vld [vmem:[#allocation9 + $0x60] sm:$0xff]
        %v487 = vld [vmem:[#allocation9 + $0x68] sm:$0xff]
        %v488 = vld [vmem:[#allocation9 + $0x70] sm:$0xff]
        %v489 = vld [vmem:[#allocation9 + $0x78] sm:$0xff]
        %490 = vmatprep.subr.mxu0 0.0
        %491 = vmatpush1.msra.mxu0 %v489
        %492 = vmatprep.subr.mxu0 0.0
        %493 = vmatpush1.msra.mxu0 %v488
        %494 = vmatprep.subr.mxu0 0.0
        %495 = vmatpush1.msra.mxu0 %v487
        %496 = vmatprep.subr.mxu0 0.0
        %497 = vmatpush1.msra.mxu0 %v486
        %498 = vmatprep.subr.mxu0 0.0
        %499 = vmatpush1.msra.mxu0 %v485
        %500 = vmatprep.subr.mxu0 0.0
        %501 = vmatpush1.msra.mxu0 %v484
        %502 = vmatprep.subr.mxu0 0.0
        %503 = vmatpush1.msra.mxu0 %v483
        %504 = vmatprep.subr.mxu0 0.0
        %505 = vmatpush1.msra.mxu0 %v482
        %506 = vmatprep.subr.mxu0 0.0
        %507 = vmatpush1.msra.mxu0 %v481
        %508 = vmatprep.subr.mxu0 0.0
        %509 = vmatpush1.msra.mxu0 %v480
        %510 = vmatprep.subr.mxu0 0.0
        %511 = vmatpush1.msra.mxu0 %v479
        %512 = vmatprep.subr.mxu0 0.0
        %513 = vmatpush1.msra.mxu0 %v478
        %514 = vmatprep.subr.mxu0 0.0
        %515 = vmatpush1.msra.mxu0 %v477
        %516 = vmatprep.subr.mxu0 0.0
        %517 = vmatpush1.msra.mxu0 %v476
        %518 = vmatprep.subr.mxu0 0.0
        %519 = vmatpush1.msra.mxu0 %v475
        %520 = vmatprep.subr.mxu0 0.0
        %521 = vmatpush1.msra.mxu0 %v474
        %522 = vmatprep.subr.mxu0 0.0
        %523 = vmatpush2.msra.mxu0 0.0
        %524 = vmatprep.subr.mxu0 0.0
        %525 = vmatpush2.msra.mxu0 0.0
        %526 = vmatprep.subr.mxu0 0.0
        %527 = vmatpush2.msra.mxu0 0.0
        %528 = vmatprep.subr.mxu0 0.0
        %529 = vmatpush2.msra.mxu0 0.0
        %530 = vmatprep.subr.mxu0 0.0
        %531 = vmatpush2.msra.mxu0 0.0
        %532 = vmatprep.subr.mxu0 0.0
        %533 = vmatpush2.msra.mxu0 0.0
        %534 = vmatprep.subr.mxu0 0.0
        %535 = vmatpush2.msra.mxu0 0.0
        %536 = vmatprep.subr.mxu0 0.0
        %537 = vmatpush2.msra.mxu0 0.0
        %538 = vmatprep.subr.mxu0 0.0
        %539 = vmatpush2.msra.mxu0 0.0
        %540 = vmatprep.subr.mxu0 0.0
        %541 = vmatpush2.msra.mxu0 0.0
        %542 = vmatprep.subr.mxu0 0.0
        %543 = vmatpush2.msra.mxu0 0.0
        %544 = vmatprep.subr.mxu0 0.0
        %545 = vmatpush2.msra.mxu0 0.0
        %546 = vmatprep.subr.mxu0 0.0
        %547 = vmatpush2.msra.mxu0 0.0
        %548 = vmatprep.subr.mxu0 0.0
        %549 = vmatpush2.msra.mxu0 0.0
        %550 = vmatprep.subr.mxu0 0.0
        %551 = vmatpush2.msra.mxu0 0.0
        %552 = vmatprep.subr.mxu0 0.0
        %553 = vmatpush2.msra.mxu0 0.0
        %554 = vmatprep.mubr.f32.mxu0 0.0
        %555 = vmatmul.mubr.f32.gmra.mxu0 %v473
        %v556 = vpop.f32.mrf.mxu0
        %v557 = vadd.f32 0.0, %v556
        %v558 = vpop.f32.mrf.mxu0
        %559 = vdwg.mxu0
        %v560 = vadd.f32 %v470, %v557
        %561 = vst [vmem:[#allocation2] sm:$0xff] %v560
        // Predicated region
        $region61: #{tpu_custom_call.1} parent=39 // pred_check
          %p562 = pneg %p359
        $region62: #{tpu_custom_call.1} parent=39 // pred_check_branch
          %564 = sbr.rel (%p562) target = $region64
        $region63: #{tpu_custom_call.1} parent=39 // pred_region
          %v565 = vld [vmem:[#allocation2] sm:$0xff]
          %v566 = vld [vmem:[%s358] sm:$0x1]
          %v568 = vlaneseq
          %v569 = vshrl.u32 %v568, 7
          %v570 = vsub.s32 0, %v569
          %v571 = vrot.slane %v566, %v570
          %v573 = vadd.f32 %v565, %v571
          %574 = vst [vmem:[%s345] sm:$0xff] %v573
        $region64: #{tpu_custom_call.1} parent=39 // pred_fallthru
          _
        %s575 = sand.u32 %s192, 1
        %s576 = scalar_lea.sflag [#allocation6], %s575
        %s577 = sand.u32 %s192, 1
        %s578 = smul.addr %s577, 8
        %s579 = scalar_lea.vmem [#allocation10], %s578
        // Predicated region
        $region65: #{tpu_custom_call.1} parent=39 // pred_check
          %p580 = pneg %p202
        $region66: #{tpu_custom_call.1} parent=39 // pred_check_branch
          %582 = sbr.rel (%p580) target = $region68
        $region67: #{tpu_custom_call.1} parent=39 // pred_region
          %s584 = ssub.s32 128, 128
          %585 = vsyncadd %s576, %s584
          %s586 = sadd.s32 %s29, %s28
          %s587 = smul.addr %s586, 128
          %s588 = scalar_lea.hbm %s5, %s587
          %s590 = sshll.u32 %s579, 4
          %s591 = int_to_ptr.vmem [resolvable:$true] %s590
          %593 = dma.vmem_to_hbm [thread:$0]  %s591, 128, %s588, %s576
        $region68: #{tpu_custom_call.1} parent=39 // pred_fallthru
          _
      $region40: #{tpu_custom_call.1} parent=5 // pred_fallthru
        _
      %p594 = scmp.le.s32.totalorder 2, %s18
      // Predicated region
      $region69: #{tpu_custom_call.1} parent=5 // pred_check
        %p595 = pneg %p594
      $region70: #{tpu_custom_call.1} parent=5 // pred_check_branch
        %597 = sbr.rel (%p595) target = $region72
      $region71: #{tpu_custom_call.1} parent=5 // pred_region
        %s598 = ssub.s32 %s18, 2
        // Predicated region
        $region73: #{tpu_custom_call.1} parent=71 // pred_check
          %p599 = pneg %p208
        $region74: #{tpu_custom_call.1} parent=71 // pred_check_branch
          %601 = sbr.rel (%p599) target = $region76
        $region75: #{tpu_custom_call.1} parent=71 // pred_region
          %s602 = sand.u32 %s193, 1
          %s603 = scalar_lea.sflag [#allocation6], %s602
          %s604 = sand.u32 %s193, 1
          %s605 = smul.addr %s604, 8
          %s606 = scalar_lea.vmem [#allocation10], %s605
          %607 = dma.done %s603, 128
        $region76: #{tpu_custom_call.1} parent=71 // pred_fallthru
          _
      $region72: #{tpu_custom_call.1} parent=5 // pred_fallthru
        _
    $region6: #{tpu_custom_call.1} parent=1 // loop_footer
      %s22 = sadd.s32 1, %s18
    $region7: #{tpu_custom_call.1} parent=1 // loop_footer_branch
      %17 = sbr.rel target = $region3
    $region8: #{tpu_custom_call.1} parent=1 // loop_exit
      _
    %608 = vsyncpa [#allocation5], 1
    %s609 = scalar_lea.sflag [#allocation5], 1
    %610 = vsyncpa %s609, 1
    %611 = vsyncpa [#allocation8], 1
    %612 = vsyncpa [#allocation6], 1
    %s613 = scalar_lea.sflag [#allocation6], 1
    %614 = vsyncpa %s613, 1

</llo_original>
